<compile_context>
chip_gen: v6e
topology: v6e:2x2x1
jax: 0.10.0
libtpu: 0.0.40
codegen_flags: <defaults>
</compile_context>

<pallas_src>
import math
import jax
import jax.numpy as jnp
from jax.experimental import pallas as pl
from jax.experimental.pallas import tpu as pltpu


def _spatio_conv_kernel(a_blk_ref, w_blk_ref, b_ref, x_ref, o_ref):
    # a_blk_ref: [T*N, T*N] = kron(I_T, A_hat^T)    (VMEM-resident, const block)
    # w_blk_ref: [M, M]     = kron(I_bb, W^T)       (resident), M = bb*C
    # b_ref:     [M, 1] f32 bias (bias[d] repeated per folded batch, resident)
    # x_ref:     [M, T*N]   lane-dense slab (rows = (batch-in-block, channel))
    # o_ref:     [M, T*N]
    x = x_ref[...].astype(a_blk_ref.dtype)          # optional in-kernel bf16 cast

    # Node aggregation over source nodes m (lane-dense, one full-width dot):
    #   agg[r, t*N + n] = sum_m x[r, t*N + m] * A_hat[n, m]
    agg = jnp.dot(x, a_blk_ref[...], preferred_element_type=jnp.float32)

    # Channel mix (block-diagonal over the folded batches):
    #   mixed[(b,d), l] = sum_c W[c, d] * agg[(b,c), l]
    mixed = jnp.dot(w_blk_ref[...], agg.astype(w_blk_ref.dtype),
                    preferred_element_type=jnp.float32)

    # Bias + ReLU (the outer torch.relu is a no-op), single unmasked store.
    o_ref[...] = jnp.maximum(mixed + b_ref[...], 0.0).astype(o_ref.dtype)


def spatio_conv_layer(x, a_hat, w, bias, *, batches_per_block=None,
                      compute_dtype=jnp.float32):
    """x: [B, C, T, N] float32.  Returns [B, C, T, N] float32.

    batches_per_block: how many batches to fold into one grid step.
      Default keeps >=2 grid steps when B allows (both v7x TensorCores busy);
      on single-TC v5e/v6e pass batches_per_block=B to run a single step.
    compute_dtype: jnp.bfloat16 shrinks MXU operand width (cast happens
      INSIDE the kernel; x stays f32 in HBM).  Accumulation is f32 either
      way.  Not recommended on v5e (no native bf16 VPU/EUP).
    """
    B, C, T, N = x.shape
    if batches_per_block is None:
        batches_per_block = B // 2 if (B >= 2 and B % 2 == 0) else B
    assert B % batches_per_block == 0
    bb = batches_per_block
    n_blocks = B // bb
    M = bb * C                     # matmul M-dim / sublane rows per block
    L = T * N                      # lane dim (128 at the test shapes)

    # Free contiguous view: [B, C, T, N] -> [n_blocks, bb*C, T*N].
    x_slab = x.reshape(n_blocks, M, L)

    # Tiny one-time parameter prep (no big-tensor transposes or casts):
    eye_t = jnp.eye(T, dtype=jnp.float32)
    eye_b = jnp.eye(bb, dtype=jnp.float32)
    a_blk = jnp.kron(eye_t, a_hat.T.astype(jnp.float32)).astype(compute_dtype)
    w_blk = jnp.kron(eye_b, w.T.astype(jnp.float32)).astype(compute_dtype)
    bias_blk = jnp.tile(bias.astype(jnp.float32), bb).reshape(M, 1)

    # VMEM budget derived from the actual chip (v7x: 64 MiB physical).
    try:
        vmem_limit = min(pltpu.get_tpu_info().vmem_capacity_bytes // 2,
                         64 * 1024 * 1024)
    except Exception:
        vmem_limit = 32 * 1024 * 1024   # safe on v5e / v6e / v7x

    out_slab = pl.pallas_call(
        _spatio_conv_kernel,
        out_shape=jax.ShapeDtypeStruct((n_blocks, M, L), jnp.float32),
        grid_spec=pltpu.PrefetchScalarGridSpec(
            num_scalar_prefetch=0,
            grid=(n_blocks,),
            in_specs=[
                pl.BlockSpec((L, L), lambda i: (0, 0)),            # A_blk (resident)
                pl.BlockSpec((M, M), lambda i: (0, 0)),            # W_blk (resident)
                pl.BlockSpec((M, 1), lambda i: (0, 0)),            # bias  (resident)
                pl.BlockSpec((None, M, L), lambda i: (i, 0, 0)),   # x slab
            ],
            out_specs=pl.BlockSpec((None, M, L), lambda i: (i, 0, 0)),
        ),
        compiler_params=pltpu.CompilerParams(
            dimension_semantics=("parallel",),
            vmem_limit_bytes=vmem_limit,
        ),
    )(a_blk, w_blk, bias_blk, x_slab)

    return out_slab.reshape(B, C, T, N)


def _reference(x, a_hat, w, bias):
    # Pure-JAX reference mirroring the PyTorch forward exactly.
    x_p = jnp.transpose(x, (3, 0, 2, 1))          # [N, B, T, C]
    xw = jnp.einsum("nbtc,cd->nbtd", x_p, w)
    agg = jnp.einsum("nm,mbtd->nbtd", a_hat, xw)
    h = jax.nn.relu(agg + bias)                   # GraphConv activation
    out = jnp.transpose(h, (1, 3, 2, 0))          # back to [B, C, T, N]
    return jax.nn.relu(out)                       # outer torch.relu


if __name__ == "__main__":
    B, C, T, N = 2, 4, 8, 16
    key = jax.random.PRNGKey(0)
    k_x, k_adj, k_w, k_b = jax.random.split(key, 4)

    # Input [B, C, T, N] (PyTorch NCHW convention).
    x = jax.random.normal(k_x, (B, C, T, N), dtype=jnp.float32)

    # Deterministic synthetic graph: random adjacency + self-loops.
    adj_raw = (jax.random.uniform(k_adj, (N, N)) > 0.7).astype(jnp.float32)
    adj = jnp.maximum(adj_raw, adj_raw.T) + jnp.eye(N, dtype=jnp.float32)
    deg = jnp.sum(adj, axis=1)
    d_inv_sqrt = 1.0 / jnp.sqrt(deg)
    # Symmetric normalization D^{-1/2} (A+I) D^{-1/2}  (stands in for Lk)...
    a_hat_sym = adj * d_inv_sqrt[:, None] * d_inv_sqrt[None, :]
    # ...and an ASYMMETRIC random-walk normalization D^{-1} (A+I) so a
    # transposition bug in the aggregation dot cannot hide behind symmetry.
    a_hat_rw = adj * (1.0 / deg)[:, None]

    # GraphConv params: W [C, C] uniform(-stdv, stdv) per the module's init();
    # non-zero bias so the bias-broadcast path is exercised.
    stdv = 1.0 / math.sqrt(C)
    w = jax.random.uniform(k_w, (C, C), minval=-stdv, maxval=stdv,
                           dtype=jnp.float32)
    bias = jax.random.uniform(k_b, (C,), minval=-stdv, maxval=stdv,
                              dtype=jnp.float32)

    for name, a_hat in (("sym", a_hat_sym), ("rw", a_hat_rw)):
        ref = _reference(x, a_hat, w, bias)

        # Default tiling: 2 parallel grid steps (v7x dual-TC friendly).
        out = jax.block_until_ready(spatio_conv_layer(x, a_hat, w, bias))
        assert out.shape == (B, C, T, N)
        assert jnp.allclose(out, ref, atol=1e-5, rtol=1e-5), \
            f"f32 mismatch vs reference ({name})"

        # Fully-folded single-step variant (v5e/v6e single-TC tuning,
        # exercises kron(I_B, W^T)).
        out_folded = jax.block_until_ready(
            spatio_conv_layer(x, a_hat, w, bias, batches_per_block=B))
        assert jnp.allclose(out_folded, ref, atol=1e-5, rtol=1e-5), \
            f"folded f32 mismatch vs reference ({name})"

    # bf16 compute path (in-kernel cast only; f32 accumulation, loose tol).
    ref = _reference(x, a_hat_rw, w, bias)
    out_bf16 = jax.block_until_ready(
        spatio_conv_layer(x, a_hat_rw, w, bias, compute_dtype=jnp.bfloat16))
    assert jnp.allclose(out_bf16, ref, atol=1e-1, rtol=1e-1), \
        "bf16 mismatch vs reference"

    print("KERNEL_OK")
</pallas_src>

<mosaic_0001>
module attributes {stable_mosaic.version = 11 : i64} {
  func.func @_spatio_conv_kernel(%arg0: i32, %arg1: memref<128x128xf32, #tpu.memory_space<vmem>>, %arg2: memref<4x4xf32, #tpu.memory_space<vmem>>, %arg3: memref<4x1xf32, #tpu.memory_space<vmem>>, %arg4: memref<1x4x128xf32, #tpu.memory_space<vmem>>, %arg5: memref<1x4x128xf32, #tpu.memory_space<vmem>>) attributes {dimension_semantics = [#tpu.dimension_semantics<parallel>], iteration_bounds = array<i64: 2>, scalar_prefetch = 0 : i64, scratch_operands = 0 : i64, tpu.core_type = #tpu.core_type<tc>, window_params = [{pipeline_mode = #tpu.pipeline_mode<synchronous>, transform_indices = @transform_0, window_bounds = array<i64: 128, 128>}, {pipeline_mode = #tpu.pipeline_mode<synchronous>, transform_indices = @transform_1, window_bounds = array<i64: 4, 4>}, {pipeline_mode = #tpu.pipeline_mode<synchronous>, transform_indices = @transform_2, window_bounds = array<i64: 4, 1>}, {transform_indices = @transform_3, window_bounds = array<i64: 1, 4, 128>}, {transform_indices = @transform_4, window_bounds = array<i64: 1, 4, 128>}]} {
    %c0 = arith.constant 0 : index
    %c0_0 = arith.constant 0 : index
    %c0_1 = arith.constant 0 : index
    %0 = vector.load %arg4[%c0, %c0_0, %c0_1] : memref<1x4x128xf32, #tpu.memory_space<vmem>>, vector<1x4x128xf32>
    %1 = vector.shape_cast %0 : vector<1x4x128xf32> to vector<4x128xf32>
    %c0_2 = arith.constant 0 : index
    %c0_3 = arith.constant 0 : index
    %2 = vector.load %arg1[%c0_2, %c0_3] : memref<128x128xf32, #tpu.memory_space<vmem>>, vector<128x128xf32>
    %cst = arith.constant dense<0.000000e+00> : vector<4x128xf32>
    %3 = tpu.matmul %1, %2, %cst {dimension_numbers = #tpu.dot_dimension_numbers<[1], [0], [0], [1], [0, 0, 1, 1], [], []>} : vector<4x128xf32>, vector<128x128xf32>, vector<4x128xf32> -> vector<4x128xf32>
    %c0_4 = arith.constant 0 : index
    %c0_5 = arith.constant 0 : index
    %4 = vector.load %arg2[%c0_4, %c0_5] : memref<4x4xf32, #tpu.memory_space<vmem>>, vector<4x4xf32>
    %cst_6 = arith.constant dense<0.000000e+00> : vector<4x128xf32>
    %5 = tpu.matmul %4, %3, %cst_6 {dimension_numbers = #tpu.dot_dimension_numbers<[1], [0], [0], [1], [0, 0, 1, 1], [], []>} : vector<4x4xf32>, vector<4x128xf32>, vector<4x128xf32> -> vector<4x128xf32>
    %c0_7 = arith.constant 0 : index
    %c0_8 = arith.constant 0 : index
    %6 = vector.load %arg3[%c0_7, %c0_8] : memref<4x1xf32, #tpu.memory_space<vmem>>, vector<4x1xf32>
    %7 = vector.broadcast %6 : vector<4x1xf32> to vector<4x128xf32>
    %8 = arith.addf %5, %7 : vector<4x128xf32>
    %cst_9 = arith.constant 0.000000e+00 : f32
    %9 = vector.broadcast %cst_9 : f32 to vector<4x128xf32>
    %10 = arith.maximumf %8, %9 : vector<4x128xf32>
    %c0_10 = arith.constant 0 : index
    %c0_11 = arith.constant 0 : index
    %c0_12 = arith.constant 0 : index
    %11 = vector.load %arg5[%c0_10, %c0_11, %c0_12] : memref<1x4x128xf32, #tpu.memory_space<vmem>>, vector<1x4x128xf32>
    %12 = vector.shape_cast %11 : vector<1x4x128xf32> to vector<4x128xf32>
    %13 = vector.shape_cast %10 : vector<4x128xf32> to vector<1x4x128xf32>
    tpu.vector_store %arg5[%c0_10, %c0_11, %c0_12], %13 {strides = array<i32>} : memref<1x4x128xf32, #tpu.memory_space<vmem>>, vector<1x4x128xf32>,
    return
  }
  func.func @transform_0(%arg0: i32) -> (i32, i32) {
    %c0_i32 = arith.constant 0 : i32
    %c0_i32_0 = arith.constant 0 : i32
    %c0_i32_1 = arith.constant 0 : i32
    return %c0_i32, %c0_i32_0 : i32, i32
  }
  func.func @transform_1(%arg0: i32) -> (i32, i32) {
    %c0_i32 = arith.constant 0 : i32
    %c0_i32_0 = arith.constant 0 : i32
    %c0_i32_1 = arith.constant 0 : i32
    return %c0_i32, %c0_i32_0 : i32, i32
  }
  func.func @transform_2(%arg0: i32) -> (i32, i32) {
    %c0_i32 = arith.constant 0 : i32
    %c0_i32_0 = arith.constant 0 : i32
    %c0_i32_1 = arith.constant 0 : i32
    return %c0_i32, %c0_i32_0 : i32, i32
  }
  func.func @transform_3(%arg0: i32) -> (i32, i32, i32) {
    %c0_i32 = arith.constant 0 : i32
    %c0_i32_0 = arith.constant 0 : i32
    %c0_i32_1 = arith.constant 0 : i32
    return %arg0, %c0_i32, %c0_i32_0 : i32, i32, i32
  }
  func.func @transform_4(%arg0: i32) -> (i32, i32, i32) {
    %c0_i32 = arith.constant 0 : i32
    %c0_i32_0 = arith.constant 0 : i32
    %c0_i32_1 = arith.constant 0 : i32
    return %arg0, %c0_i32, %c0_i32_0 : i32, i32, i32
  }
}

</mosaic_0001>

<llo_original>
// kernel: tpu_custom_call.1
$region0: #{tpu_custom_call.1}
  #allocation0 [shape = 'u32[]', space=smem, size = 0x4, offset = 0x4, fixed_abs, tag = 'smem constant byte address 0x4 - core index']
  #allocation1 [shape = 'u32[144,128]{1,0:T(1,128)}', space=vmem, size = 0x12000, scoped, tag = 'internal scratch']
  %s0 = inlined_call_operand.hbm [shape: f32[128,128], index: 0, kind: input, shape index: {}]
  %s1 = inlined_call_operand.hbm [shape: f32[4,4], index: 1, kind: input, shape index: {}]
  %s2 = inlined_call_operand.vmem [shape: f32[4,1], index: 2, kind: input, shape index: {}]
  %s3 = inlined_call_operand.vmem [shape: f32[2,4,128], index: 3, kind: input, shape index: {}]
  %s4 = inlined_call_operand.hbm [shape: f32[2,4,128], index: 4, kind: output, shape index: {}]
  %s5 = sld [smem:[#allocation0]]
  $region57: #{tpu_custom_call.1} parent=0
    _
  %s7 = ssub.s32 1, %s5
  %s8 = scalar_select 0, %s7, %s5
  $region1: #{tpu_custom_call.1} parent=0
    #allocation2 [shape = 'u8[65536]{0}', space=vmem, size = 0x10000, scoped, tag = 'input window, operand 0, single buffered']
    #allocation3 [shape = 's32[2]{0}', space=sflag, size = 0x8, scoped, tag = 'scoped memory for tpu_custom_call.1']
    #allocation4 [shape = 's32[2]{0}', space=sflag, size = 0x8, scoped, tag = 'scoped memory for tpu_custom_call.1']
    #allocation5 [shape = 'u8[2048]{0}', space=vmem, size = 0x800, scoped, tag = 'input window, operand 1, single buffered']
    #allocation6 [shape = 's32[1]{0}', space=sflag, size = 0x4, scoped, tag = 'scoped memory for tpu_custom_call.1']
    #allocation7 [shape = 'u8[4096]{0}', space=vmem, size = 0x1000, scoped, tag = 'output window, operand 0']
    %9 = vsyncpa [#allocation3], 0
    %10 = vsyncpa [#allocation6], 0
    %11 = vsyncpa [#allocation4], 0
    %s12 = scalar_lea.sflag [#allocation4], 1
    %13 = vsyncpa %s12, 0
    loop: start=0, step=1, limit=4
    $region2: #{tpu_custom_call.1} parent=1 // loop_pre_header
      _
    $region3: #{tpu_custom_call.1} parent=1 // loop_header
      %s15 = sphi 0, %s19
      %p16 = scmp.ge.s32.totalorder %s15, 4
      %s23 = sphi 0, %s23
      %s25 = sphi 0, %s23
      %s26 = sphi 0, %s25
      %s40 = sphi 0, %s26
      %s44 = sphi 0, %s44
      %s46 = sphi 0, %s44
      %s47 = sphi 0, %s46
      %s61 = sphi 0, %s47
      %s65 = sphi 0, %s65
      %s67 = sphi 0, %s65
      %s68 = sphi 0, %s67
      %s82 = sphi 0, %s68
      %s88 = sphi 0, %s90
      %s91 = sphi 0, %s88
      %s92 = sphi 0, %s91
      %s108 = sphi 0, %s92
      %s114 = sphi 0, %s116
      %s117 = sphi 0, %s114
      %s118 = sphi 0, %s117
      %s134 = sphi 0, %s118
    $region4: #{tpu_custom_call.1} parent=1 // loop_header_branch
      %18 = sbr.rel (%p16) target = $region8
    $region5: #{tpu_custom_call.1} parent=1 // loop_body
      %s20 = ssub.s32 %s15, 1
      %s21 = ssub.s32 %s15, 2
      %s22 = sadd.s32 %s15, 1
      %s24 = sadd.s32 %s23, 1
      %p27 = scmp.eq.s32.totalorder %s15, 1
      %p28 = scmp.ne.s32.totalorder %s23, %s25
      %p29 = scmp.eq.s32.totalorder %s15, 0
      %p30 = por %p28, %p29
      %p31 = scmp.ne.s32.totalorder %s23, %s25
      %p32 = scmp.eq.s32.totalorder %s20, 1
      %p33 = por %p31, %p32
      %p34 = scmp.ne.s32.totalorder %s25, %s26
      %p35 = scmp.eq.s32.totalorder %s20, 0
      %p36 = por %p34, %p35
      %p37 = scmp.ne.s32.totalorder %s25, %s26
      %p38 = scmp.eq.s32.totalorder %s21, 1
      %p39 = por %p37, %p38
      %p41 = scmp.ne.s32.totalorder %s26, %s40
      %p42 = scmp.eq.s32.totalorder %s21, 0
      %p43 = por %p41, %p42
      %s45 = sadd.s32 %s44, 1
      %p48 = scmp.eq.s32.totalorder %s15, 1
      %p49 = scmp.ne.s32.totalorder %s44, %s46
      %p50 = scmp.eq.s32.totalorder %s15, 0
      %p51 = por %p49, %p50
      %p52 = scmp.ne.s32.totalorder %s44, %s46
      %p53 = scmp.eq.s32.totalorder %s20, 1
      %p54 = por %p52, %p53
      %p55 = scmp.ne.s32.totalorder %s46, %s47
      %p56 = scmp.eq.s32.totalorder %s20, 0
      %p57 = por %p55, %p56
      %p58 = scmp.ne.s32.totalorder %s46, %s47
      %p59 = scmp.eq.s32.totalorder %s21, 1
      %p60 = por %p58, %p59
      %p62 = scmp.ne.s32.totalorder %s47, %s61
      %p63 = scmp.eq.s32.totalorder %s21, 0
      %p64 = por %p62, %p63
      %s66 = sadd.s32 %s65, 1
      %p69 = scmp.eq.s32.totalorder %s15, 1
      %p70 = scmp.ne.s32.totalorder %s65, %s67
      %p71 = scmp.eq.s32.totalorder %s15, 0
      %p72 = por %p70, %p71
      %p73 = scmp.ne.s32.totalorder %s65, %s67
      %p74 = scmp.eq.s32.totalorder %s20, 1
      %p75 = por %p73, %p74
      %p76 = scmp.ne.s32.totalorder %s67, %s68
      %p77 = scmp.eq.s32.totalorder %s20, 0
      %p78 = por %p76, %p77
      %p79 = scmp.ne.s32.totalorder %s67, %s68
      %p80 = scmp.eq.s32.totalorder %s21, 1
      %p81 = por %p79, %p80
      %p83 = scmp.ne.s32.totalorder %s68, %s82
      %p84 = scmp.eq.s32.totalorder %s21, 0
      %p85 = por %p83, %p84
      %s86 = ssub.s32 %s15, %s22
      %p87 = scmp.eq.s32.totalorder %s86, 0
      %s89 = sadd.s32 %s88, 1
      %s90 = scalar_select %p87, %s88, %s89
      %p93 = pneg %p87
      %p94 = scmp.eq.s32.totalorder %s15, 1
      %p95 = por %p93, %p94
      %p96 = scmp.ne.s32.totalorder %s88, %s91
      %p97 = scmp.eq.s32.totalorder %s15, 0
      %p98 = por %p96, %p97
      %p99 = scmp.ne.s32.totalorder %s88, %s91
      %p100 = scmp.eq.s32.totalorder %s20, 1
      %p101 = por %p99, %p100
      %p102 = scmp.ne.s32.totalorder %s91, %s92
      %p103 = scmp.eq.s32.totalorder %s20, 0
      %p104 = por %p102, %p103
      %p105 = scmp.ne.s32.totalorder %s91, %s92
      %p106 = scmp.eq.s32.totalorder %s21, 1
      %p107 = por %p105, %p106
      %p109 = scmp.ne.s32.totalorder %s92, %s108
      %p110 = scmp.eq.s32.totalorder %s21, 0
      %p111 = por %p109, %p110
      %s112 = ssub.s32 %s15, %s22
      %p113 = scmp.eq.s32.totalorder %s112, 0
      %s115 = sadd.s32 %s114, 1
      %s116 = scalar_select %p113, %s114, %s115
      %p119 = pneg %p113
      %p120 = scmp.eq.s32.totalorder %s15, 1
      %p121 = por %p119, %p120
      %p122 = scmp.ne.s32.totalorder %s114, %s117
      %p123 = scmp.eq.s32.totalorder %s15, 0
      %p124 = por %p122, %p123
      %p125 = scmp.ne.s32.totalorder %s114, %s117
      %p126 = scmp.eq.s32.totalorder %s20, 1
      %p127 = por %p125, %p126
      %p128 = scmp.ne.s32.totalorder %s117, %s118
      %p129 = scmp.eq.s32.totalorder %s20, 0
      %p130 = por %p128, %p129
      %p131 = scmp.ne.s32.totalorder %s117, %s118
      %p132 = scmp.eq.s32.totalorder %s21, 1
      %p133 = por %p131, %p132
      %p135 = scmp.ne.s32.totalorder %s118, %s134
      %p136 = scmp.eq.s32.totalorder %s21, 0
      %p137 = por %p135, %p136
      %p138 = scmp.le.s32.totalorder 1, %s15
      %p139 = scmp.lt.s32.totalorder %s15, 3
      %p140 = pnand %p138, %p139
      %p141 = pneg %p140
      // Predicated region
      $region9: #{tpu_custom_call.1} parent=5 // pred_check
        _
      $region10: #{tpu_custom_call.1} parent=5 // pred_check_branch
        %143 = sbr.rel (%p140) target = $region12
      $region11: #{tpu_custom_call.1} parent=5 // pred_region
        %s144 = ssub.s32 %s15, 1
        // Predicated region
        $region13: #{tpu_custom_call.1} parent=11 // pred_check
          %p145 = pneg %p36
        $region14: #{tpu_custom_call.1} parent=11 // pred_check_branch
          %147 = sbr.rel (%p145) target = $region16
        $region15: #{tpu_custom_call.1} parent=11 // pred_region
          %s149 = ssub.s32 2048, 2048
          %150 = vsyncadd [#allocation3], %s149
          %s151 = sshll.u32 [#allocation2], 4
          %s152 = int_to_ptr.vmem [resolvable:$true] %s151
          %157 = dma.hbm_to_vmem [thread:$0]  %s0, 2048, %s152, [#allocation3], 128, 128, 8
        $region16: #{tpu_custom_call.1} parent=11 // pred_fallthru
          _
        // Predicated region
        $region17: #{tpu_custom_call.1} parent=11 // pred_check
          %p158 = pneg %p57
        $region18: #{tpu_custom_call.1} parent=11 // pred_check_branch
          %160 = sbr.rel (%p158) target = $region20
        $region19: #{tpu_custom_call.1} parent=11 // pred_region
          %s162 = ssub.s32 64, 64
          %163 = vsyncadd [#allocation6], %s162
          %s165 = sshll.u32 [#allocation5], 4
          %s166 = int_to_ptr.vmem [resolvable:$true] %s165
          %168 = dma.hbm_to_vmem [thread:$0]  %s1, 64, %s166, [#allocation6]
        $region20: #{tpu_custom_call.1} parent=11 // pred_fallthru
          _
        // Predicated region
        $region21: #{tpu_custom_call.1} parent=11 // pred_check
          %p169 = pneg %p78
        $region22: #{tpu_custom_call.1} parent=11 // pred_check_branch
          %171 = sbr.rel (%p169) target = $region24
        $region23: #{tpu_custom_call.1} parent=11 // pred_region
          _
        $region24: #{tpu_custom_call.1} parent=11 // pred_fallthru
          _
      $region12: #{tpu_custom_call.1} parent=5 // pred_fallthru
        _
      %p172 = scmp.lt.s32.totalorder %s15, 2
      // Predicated region
      $region25: #{tpu_custom_call.1} parent=5 // pred_check
        %p173 = pneg %p172
      $region26: #{tpu_custom_call.1} parent=5 // pred_check_branch
        %175 = sbr.rel (%p173) target = $region28
      $region27: #{tpu_custom_call.1} parent=5 // pred_region
        // Predicated region
        $region29: #{tpu_custom_call.1} parent=27 // pred_check
          %p176 = pneg %p98
        $region30: #{tpu_custom_call.1} parent=27 // pred_check_branch
          %178 = sbr.rel (%p176) target = $region32
        $region31: #{tpu_custom_call.1} parent=27 // pred_region
          %p179 = scmp.lt.s32.totalorder %s15, 1
          %s180 = scalar_select %p179, %s15, 1
          %s181 = smul.addr %s180, 4
          %s182 = scalar_lea.vmem %s3, %s181
        $region32: #{tpu_custom_call.1} parent=27 // pred_fallthru
          _
      $region28: #{tpu_custom_call.1} parent=5 // pred_fallthru
        _
      %p183 = scmp.le.s32.totalorder 1, %s15
      %p184 = scmp.lt.s32.totalorder %s15, 3
      %p185 = pnand %p183, %p184
      %p186 = pneg %p185
      // Predicated region
      $region33: #{tpu_custom_call.1} parent=5 // pred_check
        _
      $region34: #{tpu_custom_call.1} parent=5 // pred_check_branch
        %188 = sbr.rel (%p185) target = $region36
      $region35: #{tpu_custom_call.1} parent=5 // pred_region
        %s189 = ssub.s32 %s15, 1
        // Predicated region
        $region37: #{tpu_custom_call.1} parent=35 // pred_check
          %p190 = pneg %p36
        $region38: #{tpu_custom_call.1} parent=35 // pred_check_branch
          %192 = sbr.rel (%p190) target = $region40
        $region39: #{tpu_custom_call.1} parent=35 // pred_region
          %193 = dma.done [#allocation3], 2048
        $region40: #{tpu_custom_call.1} parent=35 // pred_fallthru
          _
        // Predicated region
        $region41: #{tpu_custom_call.1} parent=35 // pred_check
          %p194 = pneg %p57
        $region42: #{tpu_custom_call.1} parent=35 // pred_check_branch
          %196 = sbr.rel (%p194) target = $region44
        $region43: #{tpu_custom_call.1} parent=35 // pred_region
          %197 = dma.done [#allocation6], 64
        $region44: #{tpu_custom_call.1} parent=35 // pred_fallthru
          _
        %p198 = pneg %p36
        %p199 = pneg %p33
        %p200 = pneg %p57
        %p201 = pneg %p54
        %p202 = pneg %p78
        %p203 = pneg %p75
        %p204 = scmp.lt.s32.totalorder %s20, 1
        %s205 = scalar_select %p204, %s20, 1
        %s206 = smul.addr %s205, 4
        %s207 = scalar_lea.vmem %s3, %s206
        %p208 = pneg %p104
        %p209 = pneg %p101
        %p210 = pneg %p130
        %p211 = pneg %p127
        %s212 = sand.u32 %s117, 1
        %s213 = scalar_lea.sflag [#allocation4], %s212
        %s214 = sand.u32 %s117, 1
        %s215 = smul.addr %s214, 4
        %s216 = scalar_lea.vmem [#allocation7], %s215
        %p217 = scmp.lt.s32.totalorder %s20, 1
        %s218 = scalar_select %p217, %s20, 1
        %s219 = smul.addr %s218, 4
        %s220 = scalar_lea.vmem %s3, %s219
        %v221 = vld [vmem:[%s220] sm:$0xf]
        %v222 = vld [vmem:[#allocation2] sm:$0xff]
        %v223 = vld [vmem:[#allocation2 + $0x8] sm:$0xff]
        %v224 = vld [vmem:[#allocation2 + $0x10] sm:$0xff]
        %v225 = vld [vmem:[#allocation2 + $0x18] sm:$0xff]
        %v226 = vld [vmem:[#allocation2 + $0x20] sm:$0xff]
        %v227 = vld [vmem:[#allocation2 + $0x28] sm:$0xff]
        %v228 = vld [vmem:[#allocation2 + $0x30] sm:$0xff]
        %v229 = vld [vmem:[#allocation2 + $0x38] sm:$0xff]
        %v230 = vld [vmem:[#allocation2 + $0x40] sm:$0xff]
        %v231 = vld [vmem:[#allocation2 + $0x48] sm:$0xff]
        %v232 = vld [vmem:[#allocation2 + $0x50] sm:$0xff]
        %v233 = vld [vmem:[#allocation2 + $0x58] sm:$0xff]
        %v234 = vld [vmem:[#allocation2 + $0x60] sm:$0xff]
        %v235 = vld [vmem:[#allocation2 + $0x68] sm:$0xff]
        %v236 = vld [vmem:[#allocation2 + $0x70] sm:$0xff]
        %v237 = vld [vmem:[#allocation2 + $0x78] sm:$0xff]
        %238 = vmatprep.subr.mxu0 0.0
        %239 = vmatpush1.msra.mxu0 %v237
        %240 = vmatprep.subr.mxu0 0.0
        %241 = vmatpush1.msra.mxu0 %v236
        %242 = vmatprep.subr.mxu0 0.0
        %243 = vmatpush1.msra.mxu0 %v235
        %244 = vmatprep.subr.mxu0 0.0
        %245 = vmatpush1.msra.mxu0 %v234
        %246 = vmatprep.subr.mxu0 0.0
        %247 = vmatpush1.msra.mxu0 %v233
        %248 = vmatprep.subr.mxu0 0.0
        %249 = vmatpush1.msra.mxu0 %v232
        %250 = vmatprep.subr.mxu0 0.0
        %251 = vmatpush1.msra.mxu0 %v231
        %252 = vmatprep.subr.mxu0 0.0
        %253 = vmatpush1.msra.mxu0 %v230
        %254 = vmatprep.subr.mxu0 0.0
        %255 = vmatpush1.msra.mxu0 %v229
        %256 = vmatprep.subr.mxu0 0.0
        %257 = vmatpush1.msra.mxu0 %v228
        %258 = vmatprep.subr.mxu0 0.0
        %259 = vmatpush1.msra.mxu0 %v227
        %260 = vmatprep.subr.mxu0 0.0
        %261 = vmatpush1.msra.mxu0 %v226
        %262 = vmatprep.subr.mxu0 0.0
        %263 = vmatpush1.msra.mxu0 %v225
        %264 = vmatprep.subr.mxu0 0.0
        %265 = vmatpush1.msra.mxu0 %v224
        %266 = vmatprep.subr.mxu0 0.0
        %267 = vmatpush1.msra.mxu0 %v223
        %268 = vmatprep.subr.mxu0 0.0
        %269 = vmatpush1.msra.mxu0 %v222
        %270 = vmatprep.subr.mxu0 0.0
        %271 = vmatpush2.msra.mxu0 0.0
        %272 = vmatprep.subr.mxu0 0.0
        %273 = vmatpush2.msra.mxu0 0.0
        %274 = vmatprep.subr.mxu0 0.0
        %275 = vmatpush2.msra.mxu0 0.0
        %276 = vmatprep.subr.mxu0 0.0
        %277 = vmatpush2.msra.mxu0 0.0
        %278 = vmatprep.subr.mxu0 0.0
        %279 = vmatpush2.msra.mxu0 0.0
        %280 = vmatprep.subr.mxu0 0.0
        %281 = vmatpush2.msra.mxu0 0.0
        %282 = vmatprep.subr.mxu0 0.0
        %283 = vmatpush2.msra.mxu0 0.0
        %284 = vmatprep.subr.mxu0 0.0
        %285 = vmatpush2.msra.mxu0 0.0
        %286 = vmatprep.subr.mxu0 0.0
        %287 = vmatpush2.msra.mxu0 0.0
        %288 = vmatprep.subr.mxu0 0.0
        %289 = vmatpush2.msra.mxu0 0.0
        %290 = vmatprep.subr.mxu0 0.0
        %291 = vmatpush2.msra.mxu0 0.0
        %292 = vmatprep.subr.mxu0 0.0
        %293 = vmatpush2.msra.mxu0 0.0
        %294 = vmatprep.subr.mxu0 0.0
        %295 = vmatpush2.msra.mxu0 0.0
        %296 = vmatprep.subr.mxu0 0.0
        %297 = vmatpush2.msra.mxu0 0.0
        %298 = vmatprep.subr.mxu0 0.0
        %299 = vmatpush2.msra.mxu0 0.0
        %300 = vmatprep.subr.mxu0 0.0
        %301 = vmatpush2.msra.mxu0 0.0
        %302 = vmatprep.mubr.f32.mxu0 0.0
        %303 = vmatmul.mubr.f32.gmra.mxu0 %v221
        %v304 = vpop.f32.mrf.mxu0
        %v305 = vadd.f32 0.0, %v304
        %v306 = vpop.f32.mrf.mxu0
        %307 = vdwg.mxu0
        %v308 = vld [vmem:[#allocation5] sm:$0xf]
        %v309 = vld [vmem:[%s2] sm:$0xf]
        %311 = vset.pattern.permute.xlu0 0
        %312 = vperm.xlu0 %311, %v309
        %v313 = vpop.permute.xlu0 %312
        %vm315 = vcmask 31744
        %v317 = vsel %vm315, %v308, 0
        %vm319 = vcmask 1043456
        %v321 = vsel %vm319, %v305, 0
        %323 = vmatprep.subr.mxu0 0.0
        %324 = vmatpush1.msra.mxu0 0.0
        %325 = vmatprep.subr.mxu0 0.0
        %326 = vmatpush1.msra.mxu0 0.0
        %327 = vmatprep.subr.mxu0 0.0
        %328 = vmatpush1.msra.mxu0 0.0
        %329 = vmatprep.subr.mxu0 0.0
        %330 = vmatpush1.msra.mxu0 0.0
        %331 = vmatprep.subr.mxu0 0.0
        %332 = vmatpush1.msra.mxu0 0.0
        %333 = vmatprep.subr.mxu0 0.0
        %334 = vmatpush1.msra.mxu0 0.0
        %335 = vmatprep.subr.mxu0 0.0
        %336 = vmatpush1.msra.mxu0 0.0
        %337 = vmatprep.subr.mxu0 0.0
        %338 = vmatpush1.msra.mxu0 0.0
        %339 = vmatprep.subr.mxu0 0.0
        %340 = vmatpush1.msra.mxu0 0.0
        %341 = vmatprep.subr.mxu0 0.0
        %342 = vmatpush1.msra.mxu0 0.0
        %343 = vmatprep.subr.mxu0 0.0
        %344 = vmatpush1.msra.mxu0 0.0
        %345 = vmatprep.subr.mxu0 0.0
        %346 = vmatpush1.msra.mxu0 0.0
        %347 = vmatprep.subr.mxu0 0.0
        %348 = vmatpush1.msra.mxu0 0.0
        %349 = vmatprep.subr.mxu0 0.0
        %350 = vmatpush1.msra.mxu0 0.0
        %351 = vmatprep.subr.mxu0 0.0
        %352 = vmatpush1.msra.mxu0 0.0
        %353 = vmatprep.subr.mxu0 0.0
        %354 = vmatpush1.msra.mxu0 %v321
        %355 = vmatprep.subr.mxu0 0.0
        %356 = vmatpush2.msra.mxu0 0.0
        %357 = vmatprep.subr.mxu0 0.0
        %358 = vmatpush2.msra.mxu0 0.0
        %359 = vmatprep.subr.mxu0 0.0
        %360 = vmatpush2.msra.mxu0 0.0
        %361 = vmatprep.subr.mxu0 0.0
        %362 = vmatpush2.msra.mxu0 0.0
        %363 = vmatprep.subr.mxu0 0.0
        %364 = vmatpush2.msra.mxu0 0.0
        %365 = vmatprep.subr.mxu0 0.0
        %366 = vmatpush2.msra.mxu0 0.0
        %367 = vmatprep.subr.mxu0 0.0
        %368 = vmatpush2.msra.mxu0 0.0
        %369 = vmatprep.subr.mxu0 0.0
        %370 = vmatpush2.msra.mxu0 0.0
        %371 = vmatprep.subr.mxu0 0.0
        %372 = vmatpush2.msra.mxu0 0.0
        %373 = vmatprep.subr.mxu0 0.0
        %374 = vmatpush2.msra.mxu0 0.0
        %375 = vmatprep.subr.mxu0 0.0
        %376 = vmatpush2.msra.mxu0 0.0
        %377 = vmatprep.subr.mxu0 0.0
        %378 = vmatpush2.msra.mxu0 0.0
        %379 = vmatprep.subr.mxu0 0.0
        %380 = vmatpush2.msra.mxu0 0.0
        %381 = vmatprep.subr.mxu0 0.0
        %382 = vmatpush2.msra.mxu0 0.0
        %383 = vmatprep.subr.mxu0 0.0
        %384 = vmatpush2.msra.mxu0 0.0
        %385 = vmatprep.subr.mxu0 0.0
        %386 = vmatpush2.msra.mxu0 0.0
        %387 = vmatprep.mubr.f32.mxu0 0.0
        %388 = vmatmul.mubr.f32.gmra.mxu0 %v317
        %v389 = vpop.f32.mrf.mxu0
        %v390 = vadd.f32 %v313, %v389
        %v391 = vpop.f32.mrf.mxu0
        %392 = vdwg.mxu0
        %v393 = vmax.f32 %v390, 0.0
        %394 = vst [vmem:[%s216] sm:$0xf] %v393
        %s395 = sand.u32 %s117, 1
        %s396 = scalar_lea.sflag [#allocation4], %s395
        %s397 = sand.u32 %s117, 1
        %s398 = smul.addr %s397, 4
        %s399 = scalar_lea.vmem [#allocation7], %s398
        // Predicated region
        $region45: #{tpu_custom_call.1} parent=35 // pred_check
          %p400 = pneg %p127
        $region46: #{tpu_custom_call.1} parent=35 // pred_check_branch
          %402 = sbr.rel (%p400) target = $region48
        $region47: #{tpu_custom_call.1} parent=35 // pred_region
          %s404 = ssub.s32 64, 64
          %405 = vsyncadd %s396, %s404
          %s406 = smul.addr %s20, 64
          %s407 = scalar_lea.hbm %s4, %s406
          %s409 = sshll.u32 %s399, 4
          %s410 = int_to_ptr.vmem [resolvable:$true] %s409
          %412 = dma.vmem_to_hbm [thread:$0]  %s410, 64, %s407, %s396
        $region48: #{tpu_custom_call.1} parent=35 // pred_fallthru
          _
      $region36: #{tpu_custom_call.1} parent=5 // pred_fallthru
        _
      %p413 = scmp.le.s32.totalorder 2, %s15
      // Predicated region
      $region49: #{tpu_custom_call.1} parent=5 // pred_check
        %p414 = pneg %p413
      $region50: #{tpu_custom_call.1} parent=5 // pred_check_branch
        %416 = sbr.rel (%p414) target = $region52
      $region51: #{tpu_custom_call.1} parent=5 // pred_region
        %s417 = ssub.s32 %s15, 2
        // Predicated region
        $region53: #{tpu_custom_call.1} parent=51 // pred_check
          %p418 = pneg %p133
        $region54: #{tpu_custom_call.1} parent=51 // pred_check_branch
          %420 = sbr.rel (%p418) target = $region56
        $region55: #{tpu_custom_call.1} parent=51 // pred_region
          %s421 = sand.u32 %s118, 1
          %s422 = scalar_lea.sflag [#allocation4], %s421
          %s423 = sand.u32 %s118, 1
          %s424 = smul.addr %s423, 4
          %s425 = scalar_lea.vmem [#allocation7], %s424
          %426 = dma.done %s422, 64
        $region56: #{tpu_custom_call.1} parent=51 // pred_fallthru
          _
      $region52: #{tpu_custom_call.1} parent=5 // pred_fallthru
        _
    $region6: #{tpu_custom_call.1} parent=1 // loop_footer
      %s19 = sadd.s32 1, %s15
    $region7: #{tpu_custom_call.1} parent=1 // loop_footer_branch
      %14 = sbr.rel target = $region3
    $region8: #{tpu_custom_call.1} parent=1 // loop_exit
      _
    %427 = vsyncpa [#allocation3], 1
    %s428 = scalar_lea.sflag [#allocation3], 1
    %429 = vsyncpa %s428, 1
    %430 = vsyncpa [#allocation6], 1
    %431 = vsyncpa [#allocation4], 1
    %s432 = scalar_lea.sflag [#allocation4], 1
    %433 = vsyncpa %s432, 1

</llo_original>
